<compile_context>
chip_gen: v5e
topology: v5e:2x2
jax: 0.10.0
libtpu: 0.0.40
codegen_flags: <defaults>
</compile_context>

<pallas_src>
import functools
import math

import jax
import jax.numpy as jnp
from jax import lax
from jax.experimental import pallas as pl
from jax.experimental.pallas import tpu as pltpu


# ---------------------------------------------------------------------------
# Fused QKV-projection + attention kernel.  Grid: (B, nH // head_block)
# ---------------------------------------------------------------------------
def fused_self_attention_kernel(x_ref, w_ref, b_ref, m_ref, ctx_ref,
                                *probs_refs,
                                head_block, head_dim, compute_dtype):
    n = head_block * head_dim
    probs_ref = probs_refs[0] if probs_refs else None
    hb_idx = pl.program_id(1)

    x = x_ref[0]                       # (S, H)    compute_dtype (resident per b)
    w = w_ref[hb_idx]                  # (H, 3n)   compute_dtype (grid-resident)
    bias = b_ref[hb_idx]               # (1, 3n)   f32           (grid-resident)
    mask = m_ref[0, 0]                 # (Mq, S)   f32, Mq in {1, S}

    # One fused MXU pass for this head block's Q|K|V columns (f32 accumulate).
    # Q columns are pre-scaled by 1/gamma on the host.
    qkv = jnp.dot(x, w, preferred_element_type=jnp.float32) + bias   # (S, 3n)
    q = qkv[:, 0 * n:1 * n]
    k = qkv[:, 1 * n:2 * n]
    v = qkv[:, 2 * n:3 * n]

    ctx_parts = []
    for h in range(head_block):        # small static unroll (head_block <= 4 typ.)
        sl = slice(h * head_dim, (h + 1) * head_dim)
        q_h = q[:, sl].astype(compute_dtype)     # (S, D)
        k_h = k[:, sl].astype(compute_dtype)     # (S, D)
        v_h = v[:, sl].astype(compute_dtype)     # (S, D)

        # QK^T without materializing a transpose: contract the last dims.
        scores = lax.dot_general(q_h, k_h, (((1,), (1,)), ((), ())),
                                 preferred_element_type=jnp.float32)  # (S, S)
        scores = scores + mask                                         # f32

        mx = jnp.max(scores, axis=-1, keepdims=True)
        e = jnp.exp(scores - mx)
        denom = jnp.sum(e, axis=-1, keepdims=True)

        # TODO(synk): dropout(attention_probs) / head_mask omitted (identity).
        if probs_ref is None:
            # Deferred normalization: scale the (S, D) result, not (S, S) probs.
            ctx = jnp.dot(e.astype(compute_dtype), v_h,
                          preferred_element_type=jnp.float32)          # (S, D)
            ctx = ctx * pl.reciprocal(denom, approx=True)
        else:
            # Exact reciprocal: probs are a user-visible output, rows sum to 1.
            probs = e * pl.reciprocal(denom, approx=False)             # (S, S)
            ctx = jnp.dot(probs.astype(compute_dtype), v_h,
                          preferred_element_type=jnp.float32)          # (S, D)
            probs_ref[0, h] = probs.astype(probs_ref.dtype)
        ctx_parts.append(ctx)

    # Single lane-dense (S, head_block*D) store instead of per-head column writes.
    ctx_slab = ctx_parts[0] if head_block == 1 else jnp.concatenate(ctx_parts, -1)
    ctx_ref[0] = ctx_slab.astype(ctx_ref.dtype)


def _pick_head_block(num_heads, head_dim, cap=4):
    """Smallest head batch (<= cap) whose ctx slab is lane-dense (multiple of
    128 lanes).  Fallback = all heads (full-extent last dim, always legal)."""
    for hb in range(1, min(num_heads, cap) + 1):
        if num_heads % hb == 0 and (hb * head_dim) % 128 == 0:
            return hb
    # TODO(synk): unaligned fallback keeps all heads in one block; add Sq/KV
    #             tiling before using this path with large num_heads / S.
    return num_heads


# ---------------------------------------------------------------------------
# Module wrapper (host-side work is one-time weight re-layout only)
# ---------------------------------------------------------------------------
def bert_self_attention(hidden_states, attention_mask, params,
                        num_attention_heads, *,
                        output_attentions=False,
                        compute_dtype=jnp.bfloat16,
                        head_block=None):
    B, S, H = hidden_states.shape
    nH = num_attention_heads
    assert H % nH == 0
    D = H // nH
    gamma = math.sqrt(D)

    if head_block is None:
        head_block = _pick_head_block(nH, D)
    assert nH % head_block == 0
    nHB = nH // head_block
    n = head_block * D

    # --- one-time parameter prep (would live at weight-load time) ----------
    # Fold 1/gamma into the Q projection so the kernel never scales Q.
    wq = params["wq"].astype(jnp.float32) * (1.0 / gamma)
    bq = params["bq"].astype(jnp.float32) * (1.0 / gamma)
    wk = params["wk"].astype(jnp.float32)
    bk = params["bk"].astype(jnp.float32)
    wv = params["wv"].astype(jnp.float32)
    bv = params["bv"].astype(jnp.float32)

    def w_blocks(w):        # (H, H) -> (nHB, H, n): per-head-block column slabs
        return w.reshape(H, nHB, n).transpose(1, 0, 2)

    def b_blocks(b):        # (H,) -> (nHB, 1, n)
        return b.reshape(nHB, 1, n)

    # Fused per-head-block weight: [Q | K | V] columns -> one (H, 3n) matmul.
    w_fused = jnp.concatenate([w_blocks(wq), w_blocks(wk), w_blocks(wv)],
                              axis=-1).astype(compute_dtype)   # (nHB, H, 3n)
    b_fused = jnp.concatenate([b_blocks(bq), b_blocks(bk), b_blocks(bv)],
                              axis=-1)                          # (nHB, 1, 3n) f32

    # Mask: accept (B,1,1,S), (B,1,S,S), (B,S,S) or (B,S) additive masks.
    if attention_mask is None:
        mask = jnp.zeros((B, 1, 1, S), jnp.float32)
    else:
        mask = jnp.asarray(attention_mask, jnp.float32)
        if mask.ndim == 2:                      # (B, S)
            mask = mask[:, None, None, :]
        elif mask.ndim == 3:                    # (B, Sq, S)
            mask = mask[:, None, :, :]
        if mask.shape[1] != 1:
            # TODO(synk): per-head additive masks not supported; heads share mask.
            mask = mask[:, :1]
        mask = jnp.broadcast_to(mask, (B, 1, mask.shape[2], S))
    Mq = mask.shape[2]

    x = hidden_states.astype(compute_dtype)

    in_specs = [
        # hidden block: constant over the head-block axis -> resident per batch.
        pl.BlockSpec((1, S, H), lambda b, hb: (b, 0, 0)),
        # fused weight / bias: constant index -> resident for the WHOLE grid
        # (fetched from HBM once, not once per batch element).
        pl.BlockSpec((nHB, H, 3 * n), lambda b, hb: (0, 0, 0)),
        pl.BlockSpec((nHB, 1, 3 * n), lambda b, hb: (0, 0, 0)),
        pl.BlockSpec((1, 1, Mq, S), lambda b, hb: (b, 0, 0, 0)),
    ]
    ctx_spec = pl.BlockSpec((1, S, n), lambda b, hb: (b, 0, hb))
    ctx_sds = jax.ShapeDtypeStruct((B, S, H), compute_dtype)

    if output_attentions:
        out_specs = (ctx_spec,
                     pl.BlockSpec((1, head_block, S, S),
                                  lambda b, hb: (b, hb, 0, 0)))
        out_shape = (ctx_sds,
                     jax.ShapeDtypeStruct((B, nH, S, S), compute_dtype))
    else:
        out_specs = ctx_spec
        out_shape = ctx_sds

    # Size the scoped VMEM limit to the real working set (v5e/v6e defaults are
    # 16/32 MiB); cap at 64 MiB so the setting stays legal on v7x.
    isz = jnp.dtype(compute_dtype).itemsize
    est = (2 * S * H * isz                 # x block (double-buffered)
           + nHB * H * 3 * n * isz         # resident fused weight
           + nHB * 3 * n * 4               # resident bias
           + 2 * Mq * S * 4                # mask block
           + 2 * S * n * isz               # ctx out block
           + S * 3 * n * 4                 # qkv f32 temp
           + 3 * S * S * 4                 # scores / e / probs temps
           + head_block * S * D * 4)       # ctx parts
    if output_attentions:
        est += 2 * head_block * S * S * isz
    vmem_limit = int(min(64 * 1024 * 1024, max(32 * 1024 * 1024, 2 * est)))

    kernel = functools.partial(fused_self_attention_kernel,
                               head_block=head_block, head_dim=D,
                               compute_dtype=compute_dtype)

    out = pl.pallas_call(
        kernel,
        out_shape=out_shape,
        grid=(B, nHB),
        in_specs=in_specs,
        out_specs=out_specs,
        compiler_params=pltpu.CompilerParams(
            dimension_semantics=("parallel", "parallel"),
            vmem_limit_bytes=vmem_limit),
    )(x, w_fused, b_fused, mask)

    if output_attentions:
        context, attention_probs = out
        return context, attention_probs
    return (out,)


# ---------------------------------------------------------------------------
# Pure-JAX f32 reference for correctness checking
# ---------------------------------------------------------------------------
def bert_self_attention_ref(hidden_states, attention_mask, params, nH):
    B, S, H = hidden_states.shape
    D = H // nH
    gamma = math.sqrt(D)
    q = hidden_states @ params["wq"] + params["bq"]
    k = hidden_states @ params["wk"] + params["bk"]
    v = hidden_states @ params["wv"] + params["bv"]

    def split(x):
        return x.reshape(B, S, nH, D).transpose(0, 2, 1, 3)

    q, k, v = split(q), split(k), split(v)
    scores = jnp.einsum("bhqd,bhkd->bhqk", q / gamma, k)
    if attention_mask is not None:
        scores = scores + attention_mask
    probs = jax.nn.softmax(scores, axis=-1)
    ctx = jnp.einsum("bhqk,bhkd->bhqd", probs, v)
    ctx = ctx.transpose(0, 2, 1, 3).reshape(B, S, H)
    return ctx, probs


if __name__ == "__main__":
    B, S, H, nH = 2, 8, 32, 4

    key = jax.random.PRNGKey(0)
    k_h, k_wq, k_wk, k_wv, k_bq, k_bk, k_bv, k_mask = jax.random.split(key, 8)

    hidden_states = jax.random.normal(k_h, (B, S, H), dtype=jnp.float32)

    # nn.Linear(H, H)-style params, stored transposed so y = x @ W + b.
    scale = 1.0 / math.sqrt(H)
    params = {
        "wq": jax.random.uniform(k_wq, (H, H), jnp.float32, -scale, scale),
        "wk": jax.random.uniform(k_wk, (H, H), jnp.float32, -scale, scale),
        "wv": jax.random.uniform(k_wv, (H, H), jnp.float32, -scale, scale),
        "bq": jax.random.uniform(k_bq, (H,), jnp.float32, -scale, scale),
        "bk": jax.random.uniform(k_bk, (H,), jnp.float32, -scale, scale),
        "bv": jax.random.uniform(k_bv, (H,), jnp.float32, -scale, scale),
    }

    # Standard BERT extended attention mask: 0 for keep, -10000 for masked.
    keep = (jax.random.uniform(k_mask, (B, S)) > 0.2).astype(jnp.float32)
    attention_mask = ((1.0 - keep) * -10000.0).reshape(B, 1, 1, S)

    ctx_ref, probs_ref = bert_self_attention_ref(
        hidden_states, attention_mask, params, nH)

    # 1) f32 MXU path, output_attentions=True (tight check, exact reciprocal).
    ctx, probs = bert_self_attention(
        hidden_states, attention_mask, params, nH,
        output_attentions=True, compute_dtype=jnp.float32)
    ctx = jax.block_until_ready(ctx)
    probs = jax.block_until_ready(probs)
    assert ctx.shape == (B, S, H)
    assert probs.shape == (B, nH, S, S)
    assert jnp.allclose(ctx, ctx_ref, atol=5e-3, rtol=5e-3)
    assert jnp.allclose(probs, probs_ref, atol=5e-3, rtol=5e-3)

    # 2) default bf16 MXU path (f32 accumulation / softmax), bf16 outputs.
    ctx_bf, probs_bf = bert_self_attention(
        hidden_states, attention_mask, params, nH, output_attentions=True)
    ctx_bf = jax.block_until_ready(ctx_bf)
    probs_bf = jax.block_until_ready(probs_bf)
    assert jnp.allclose(ctx_bf.astype(jnp.float32), ctx_ref, atol=5e-2, rtol=5e-2)
    assert jnp.allclose(probs_bf.astype(jnp.float32), probs_ref, atol=5e-2, rtol=5e-2)

    # 3) default fast path: no probs HBM writeback, deferred softmax normalize.
    (ctx_only,) = bert_self_attention(
        hidden_states, attention_mask, params, nH, output_attentions=False)
    ctx_only = jax.block_until_ready(ctx_only)
    assert ctx_only.shape == (B, S, H)
    assert jnp.allclose(ctx_only.astype(jnp.float32), ctx_ref, atol=5e-2, rtol=5e-2)

    # 4) extended (B, 1, S, S) mask path (e.g. causal / 2-D masks).
    full_mask = jnp.broadcast_to(attention_mask, (B, 1, S, S))
    ctx_ref2, _ = bert_self_attention_ref(hidden_states, full_mask, params, nH)
    (ctx_full,) = bert_self_attention(
        hidden_states, full_mask, params, nH,
        output_attentions=False, compute_dtype=jnp.float32)
    ctx_full = jax.block_until_ready(ctx_full)
    assert jnp.allclose(ctx_full, ctx_ref2, atol=5e-3, rtol=5e-3)

    print("KERNEL_OK")
</pallas_src>

<mosaic_0001>
module attributes {stable_mosaic.version = 11 : i64} {
  func.func @fused_self_attention_kernel(%arg0: i32, %arg1: i32, %arg2: memref<1x8x32xf32, #tpu.memory_space<vmem>>, %arg3: memref<1x32x96xf32, #tpu.memory_space<vmem>>, %arg4: memref<1x1x96xf32, #tpu.memory_space<vmem>>, %arg5: memref<1x1x1x8xf32, #tpu.memory_space<vmem>>, %arg6: memref<1x8x32xf32, #tpu.memory_space<vmem>>, %arg7: memref<1x4x8x8xf32, #tpu.memory_space<vmem>>) attributes {dimension_semantics = [#tpu.dimension_semantics<parallel>, #tpu.dimension_semantics<parallel>], iteration_bounds = array<i64: 2, 1>, scalar_prefetch = 0 : i64, scratch_operands = 0 : i64, tpu.core_type = #tpu.core_type<tc>, window_params = [{transform_indices = @transform_0, window_bounds = array<i64: 1, 8, 32>}, {pipeline_mode = #tpu.pipeline_mode<synchronous>, transform_indices = @transform_1, window_bounds = array<i64: 1, 32, 96>}, {pipeline_mode = #tpu.pipeline_mode<synchronous>, transform_indices = @transform_2, window_bounds = array<i64: 1, 1, 96>}, {transform_indices = @transform_3, window_bounds = array<i64: 1, 1, 1, 8>}, {transform_indices = @transform_4, window_bounds = array<i64: 1, 8, 32>}, {transform_indices = @transform_5, window_bounds = array<i64: 1, 4, 8, 8>}]} {
    %c0 = arith.constant 0 : index
    %c0_0 = arith.constant 0 : index
    %c0_1 = arith.constant 0 : index
    %0 = vector.load %arg2[%c0, %c0_0, %c0_1] : memref<1x8x32xf32, #tpu.memory_space<vmem>>, vector<1x8x32xf32>
    %1 = vector.shape_cast %0 : vector<1x8x32xf32> to vector<8x32xf32>
    %2 = arith.index_cast %arg1 : i32 to index
    %c0_2 = arith.constant 0 : index
    %c0_3 = arith.constant 0 : index
    %3 = vector.load %arg3[%2, %c0_2, %c0_3] : memref<1x32x96xf32, #tpu.memory_space<vmem>>, vector<1x32x96xf32>
    %4 = vector.shape_cast %3 : vector<1x32x96xf32> to vector<32x96xf32>
    %5 = arith.index_cast %arg1 : i32 to index
    %c0_4 = arith.constant 0 : index
    %c0_5 = arith.constant 0 : index
    %6 = vector.load %arg4[%5, %c0_4, %c0_5] : memref<1x1x96xf32, #tpu.memory_space<vmem>>, vector<1x1x96xf32>
    %7 = vector.shape_cast %6 : vector<1x1x96xf32> to vector<1x96xf32>
    %c0_6 = arith.constant 0 : index
    %c0_7 = arith.constant 0 : index
    %c0_8 = arith.constant 0 : index
    %c0_9 = arith.constant 0 : index
    %8 = vector.load %arg5[%c0_6, %c0_7, %c0_8, %c0_9] : memref<1x1x1x8xf32, #tpu.memory_space<vmem>>, vector<1x1x1x8xf32>
    %9 = vector.shape_cast %8 : vector<1x1x1x8xf32> to vector<1x8xf32>
    %cst = arith.constant dense<0.000000e+00> : vector<8x96xf32>
    %10 = tpu.matmul %1, %4, %cst {dimension_numbers = #tpu.dot_dimension_numbers<[1], [0], [0], [1], [0, 0, 1, 1], [], []>} : vector<8x32xf32>, vector<32x96xf32>, vector<8x96xf32> -> vector<8x96xf32>
    %11 = vector.broadcast %7 : vector<1x96xf32> to vector<8x96xf32>
    %12 = arith.addf %10, %11 : vector<8x96xf32>
    %13 = vector.extract_strided_slice %12 {offsets = [0, 0], sizes = [8, 32], strides = [1, 1]} : vector<8x96xf32> to vector<8x32xf32>
    %14 = vector.extract_strided_slice %12 {offsets = [0, 32], sizes = [8, 32], strides = [1, 1]} : vector<8x96xf32> to vector<8x32xf32>
    %15 = vector.extract_strided_slice %12 {offsets = [0, 64], sizes = [8, 32], strides = [1, 1]} : vector<8x96xf32> to vector<8x32xf32>
    %16 = vector.extract_strided_slice %13 {offsets = [0, 0], sizes = [8, 8], strides = [1, 1]} : vector<8x32xf32> to vector<8x8xf32>
    %17 = vector.extract_strided_slice %14 {offsets = [0, 0], sizes = [8, 8], strides = [1, 1]} : vector<8x32xf32> to vector<8x8xf32>
    %18 = vector.extract_strided_slice %15 {offsets = [0, 0], sizes = [8, 8], strides = [1, 1]} : vector<8x32xf32> to vector<8x8xf32>
    %cst_10 = arith.constant dense<0.000000e+00> : vector<8x8xf32>
    %19 = tpu.matmul %16, %17, %cst_10 {dimension_numbers = #tpu.dot_dimension_numbers<[1], [1], [0], [0], [0, 0, 1, 0], [], []>} : vector<8x8xf32>, vector<8x8xf32>, vector<8x8xf32> -> vector<8x8xf32>
    %20 = vector.broadcast %9 : vector<1x8xf32> to vector<8x8xf32>
    %21 = arith.addf %19, %20 : vector<8x8xf32>
    %cst_11 = arith.constant dense<0xFF800000> : vector<8xf32>
    %22 = vector.multi_reduction <maximumf>, %21, %cst_11 [1] : vector<8x8xf32> to vector<8xf32>
    %23 = vector.shape_cast %22 : vector<8xf32> to vector<8x1xf32>
    %24 = vector.broadcast %23 : vector<8x1xf32> to vector<8x8xf32>
    %25 = arith.subf %21, %24 : vector<8x8xf32>
    %26 = math.exp %25 : vector<8x8xf32>
    %cst_12 = arith.constant dense<0.000000e+00> : vector<8xf32>
    %27 = vector.multi_reduction <add>, %26, %cst_12 [1] : vector<8x8xf32> to vector<8xf32>
    %28 = vector.shape_cast %27 : vector<8xf32> to vector<8x1xf32>
    %29 = tpu.reciprocal %28 : vector<8x1xf32> -> vector<8x1xf32>
    %30 = vector.broadcast %29 : vector<8x1xf32> to vector<8x8xf32>
    %31 = arith.mulf %26, %30 : vector<8x8xf32>
    %cst_13 = arith.constant dense<0.000000e+00> : vector<8x8xf32>
    %32 = tpu.matmul %31, %18, %cst_13 {dimension_numbers = #tpu.dot_dimension_numbers<[1], [0], [0], [1], [0, 0, 1, 1], [], []>} : vector<8x8xf32>, vector<8x8xf32>, vector<8x8xf32> -> vector<8x8xf32>
    %c0_14 = arith.constant 0 : index
    %c0_15 = arith.constant 0 : index
    %c0_16 = arith.constant 0 : index
    %c0_17 = arith.constant 0 : index
    %33 = vector.load %arg7[%c0_14, %c0_15, %c0_16, %c0_17] : memref<1x4x8x8xf32, #tpu.memory_space<vmem>>, vector<1x1x8x8xf32>
    %34 = vector.shape_cast %33 : vector<1x1x8x8xf32> to vector<8x8xf32>
    %35 = vector.shape_cast %31 : vector<8x8xf32> to vector<1x1x8x8xf32>
    tpu.vector_store %arg7[%c0_14, %c0_15, %c0_16, %c0_17], %35 {strides = array<i32>} : memref<1x4x8x8xf32, #tpu.memory_space<vmem>>, vector<1x1x8x8xf32>,
    %36 = vector.extract_strided_slice %13 {offsets = [0, 8], sizes = [8, 8], strides = [1, 1]} : vector<8x32xf32> to vector<8x8xf32>
    %37 = vector.extract_strided_slice %14 {offsets = [0, 8], sizes = [8, 8], strides = [1, 1]} : vector<8x32xf32> to vector<8x8xf32>
    %38 = vector.extract_strided_slice %15 {offsets = [0, 8], sizes = [8, 8], strides = [1, 1]} : vector<8x32xf32> to vector<8x8xf32>
    %cst_18 = arith.constant dense<0.000000e+00> : vector<8x8xf32>
    %39 = tpu.matmul %36, %37, %cst_18 {dimension_numbers = #tpu.dot_dimension_numbers<[1], [1], [0], [0], [0, 0, 1, 0], [], []>} : vector<8x8xf32>, vector<8x8xf32>, vector<8x8xf32> -> vector<8x8xf32>
    %40 = vector.broadcast %9 : vector<1x8xf32> to vector<8x8xf32>
    %41 = arith.addf %39, %40 : vector<8x8xf32>
    %cst_19 = arith.constant dense<0xFF800000> : vector<8xf32>
    %42 = vector.multi_reduction <maximumf>, %41, %cst_19 [1] : vector<8x8xf32> to vector<8xf32>
    %43 = vector.shape_cast %42 : vector<8xf32> to vector<8x1xf32>
    %44 = vector.broadcast %43 : vector<8x1xf32> to vector<8x8xf32>
    %45 = arith.subf %41, %44 : vector<8x8xf32>
    %46 = math.exp %45 : vector<8x8xf32>
    %cst_20 = arith.constant dense<0.000000e+00> : vector<8xf32>
    %47 = vector.multi_reduction <add>, %46, %cst_20 [1] : vector<8x8xf32> to vector<8xf32>
    %48 = vector.shape_cast %47 : vector<8xf32> to vector<8x1xf32>
    %49 = tpu.reciprocal %48 : vector<8x1xf32> -> vector<8x1xf32>
    %50 = vector.broadcast %49 : vector<8x1xf32> to vector<8x8xf32>
    %51 = arith.mulf %46, %50 : vector<8x8xf32>
    %cst_21 = arith.constant dense<0.000000e+00> : vector<8x8xf32>
    %52 = tpu.matmul %51, %38, %cst_21 {dimension_numbers = #tpu.dot_dimension_numbers<[1], [0], [0], [1], [0, 0, 1, 1], [], []>} : vector<8x8xf32>, vector<8x8xf32>, vector<8x8xf32> -> vector<8x8xf32>
    %c0_22 = arith.constant 0 : index
    %c1 = arith.constant 1 : index
    %c0_23 = arith.constant 0 : index
    %c0_24 = arith.constant 0 : index
    %53 = vector.load %arg7[%c0_22, %c1, %c0_23, %c0_24] : memref<1x4x8x8xf32, #tpu.memory_space<vmem>>, vector<1x1x8x8xf32>
    %54 = vector.shape_cast %53 : vector<1x1x8x8xf32> to vector<8x8xf32>
    %55 = vector.shape_cast %51 : vector<8x8xf32> to vector<1x1x8x8xf32>
    tpu.vector_store %arg7[%c0_22, %c1, %c0_23, %c0_24], %55 {strides = array<i32>} : memref<1x4x8x8xf32, #tpu.memory_space<vmem>>, vector<1x1x8x8xf32>,
    %56 = vector.extract_strided_slice %13 {offsets = [0, 16], sizes = [8, 8], strides = [1, 1]} : vector<8x32xf32> to vector<8x8xf32>
    %57 = vector.extract_strided_slice %14 {offsets = [0, 16], sizes = [8, 8], strides = [1, 1]} : vector<8x32xf32> to vector<8x8xf32>
    %58 = vector.extract_strided_slice %15 {offsets = [0, 16], sizes = [8, 8], strides = [1, 1]} : vector<8x32xf32> to vector<8x8xf32>
    %cst_25 = arith.constant dense<0.000000e+00> : vector<8x8xf32>
    %59 = tpu.matmul %56, %57, %cst_25 {dimension_numbers = #tpu.dot_dimension_numbers<[1], [1], [0], [0], [0, 0, 1, 0], [], []>} : vector<8x8xf32>, vector<8x8xf32>, vector<8x8xf32> -> vector<8x8xf32>
    %60 = vector.broadcast %9 : vector<1x8xf32> to vector<8x8xf32>
    %61 = arith.addf %59, %60 : vector<8x8xf32>
    %cst_26 = arith.constant dense<0xFF800000> : vector<8xf32>
    %62 = vector.multi_reduction <maximumf>, %61, %cst_26 [1] : vector<8x8xf32> to vector<8xf32>
    %63 = vector.shape_cast %62 : vector<8xf32> to vector<8x1xf32>
    %64 = vector.broadcast %63 : vector<8x1xf32> to vector<8x8xf32>
    %65 = arith.subf %61, %64 : vector<8x8xf32>
    %66 = math.exp %65 : vector<8x8xf32>
    %cst_27 = arith.constant dense<0.000000e+00> : vector<8xf32>
    %67 = vector.multi_reduction <add>, %66, %cst_27 [1] : vector<8x8xf32> to vector<8xf32>
    %68 = vector.shape_cast %67 : vector<8xf32> to vector<8x1xf32>
    %69 = tpu.reciprocal %68 : vector<8x1xf32> -> vector<8x1xf32>
    %70 = vector.broadcast %69 : vector<8x1xf32> to vector<8x8xf32>
    %71 = arith.mulf %66, %70 : vector<8x8xf32>
    %cst_28 = arith.constant dense<0.000000e+00> : vector<8x8xf32>
    %72 = tpu.matmul %71, %58, %cst_28 {dimension_numbers = #tpu.dot_dimension_numbers<[1], [0], [0], [1], [0, 0, 1, 1], [], []>} : vector<8x8xf32>, vector<8x8xf32>, vector<8x8xf32> -> vector<8x8xf32>
    %c0_29 = arith.constant 0 : index
    %c2 = arith.constant 2 : index
    %c0_30 = arith.constant 0 : index
    %c0_31 = arith.constant 0 : index
    %73 = vector.load %arg7[%c0_29, %c2, %c0_30, %c0_31] : memref<1x4x8x8xf32, #tpu.memory_space<vmem>>, vector<1x1x8x8xf32>
    %74 = vector.shape_cast %73 : vector<1x1x8x8xf32> to vector<8x8xf32>
    %75 = vector.shape_cast %71 : vector<8x8xf32> to vector<1x1x8x8xf32>
    tpu.vector_store %arg7[%c0_29, %c2, %c0_30, %c0_31], %75 {strides = array<i32>} : memref<1x4x8x8xf32, #tpu.memory_space<vmem>>, vector<1x1x8x8xf32>,
    %76 = vector.extract_strided_slice %13 {offsets = [0, 24], sizes = [8, 8], strides = [1, 1]} : vector<8x32xf32> to vector<8x8xf32>
    %77 = vector.extract_strided_slice %14 {offsets = [0, 24], sizes = [8, 8], strides = [1, 1]} : vector<8x32xf32> to vector<8x8xf32>
    %78 = vector.extract_strided_slice %15 {offsets = [0, 24], sizes = [8, 8], strides = [1, 1]} : vector<8x32xf32> to vector<8x8xf32>
    %cst_32 = arith.constant dense<0.000000e+00> : vector<8x8xf32>
    %79 = tpu.matmul %76, %77, %cst_32 {dimension_numbers = #tpu.dot_dimension_numbers<[1], [1], [0], [0], [0, 0, 1, 0], [], []>} : vector<8x8xf32>, vector<8x8xf32>, vector<8x8xf32> -> vector<8x8xf32>
    %80 = vector.broadcast %9 : vector<1x8xf32> to vector<8x8xf32>
    %81 = arith.addf %79, %80 : vector<8x8xf32>
    %cst_33 = arith.constant dense<0xFF800000> : vector<8xf32>
    %82 = vector.multi_reduction <maximumf>, %81, %cst_33 [1] : vector<8x8xf32> to vector<8xf32>
    %83 = vector.shape_cast %82 : vector<8xf32> to vector<8x1xf32>
    %84 = vector.broadcast %83 : vector<8x1xf32> to vector<8x8xf32>
    %85 = arith.subf %81, %84 : vector<8x8xf32>
    %86 = math.exp %85 : vector<8x8xf32>
    %cst_34 = arith.constant dense<0.000000e+00> : vector<8xf32>
    %87 = vector.multi_reduction <add>, %86, %cst_34 [1] : vector<8x8xf32> to vector<8xf32>
    %88 = vector.shape_cast %87 : vector<8xf32> to vector<8x1xf32>
    %89 = tpu.reciprocal %88 : vector<8x1xf32> -> vector<8x1xf32>
    %90 = vector.broadcast %89 : vector<8x1xf32> to vector<8x8xf32>
    %91 = arith.mulf %86, %90 : vector<8x8xf32>
    %cst_35 = arith.constant dense<0.000000e+00> : vector<8x8xf32>
    %92 = tpu.matmul %91, %78, %cst_35 {dimension_numbers = #tpu.dot_dimension_numbers<[1], [0], [0], [1], [0, 0, 1, 1], [], []>} : vector<8x8xf32>, vector<8x8xf32>, vector<8x8xf32> -> vector<8x8xf32>
    %c0_36 = arith.constant 0 : index
    %c3 = arith.constant 3 : index
    %c0_37 = arith.constant 0 : index
    %c0_38 = arith.constant 0 : index
    %93 = vector.load %arg7[%c0_36, %c3, %c0_37, %c0_38] : memref<1x4x8x8xf32, #tpu.memory_space<vmem>>, vector<1x1x8x8xf32>
    %94 = vector.shape_cast %93 : vector<1x1x8x8xf32> to vector<8x8xf32>
    %95 = vector.shape_cast %91 : vector<8x8xf32> to vector<1x1x8x8xf32>
    tpu.vector_store %arg7[%c0_36, %c3, %c0_37, %c0_38], %95 {strides = array<i32>} : memref<1x4x8x8xf32, #tpu.memory_space<vmem>>, vector<1x1x8x8xf32>,
    %96 = tpu.concatenate %32, %52, %72, %92 in 1 : vector<8x8xf32>, vector<8x8xf32>, vector<8x8xf32>, vector<8x8xf32> -> vector<8x32xf32>
    %c0_39 = arith.constant 0 : index
    %c0_40 = arith.constant 0 : index
    %c0_41 = arith.constant 0 : index
    %97 = vector.load %arg6[%c0_39, %c0_40, %c0_41] : memref<1x8x32xf32, #tpu.memory_space<vmem>>, vector<1x8x32xf32>
    %98 = vector.shape_cast %97 : vector<1x8x32xf32> to vector<8x32xf32>
    %99 = vector.shape_cast %96 : vector<8x32xf32> to vector<1x8x32xf32>
    tpu.vector_store %arg6[%c0_39, %c0_40, %c0_41], %99 {strides = array<i32>} : memref<1x8x32xf32, #tpu.memory_space<vmem>>, vector<1x8x32xf32>,
    return
  }
  func.func @transform_0(%arg0: i32, %arg1: i32) -> (i32, i32, i32) {
    %c0_i32 = arith.constant 0 : i32
    %c0_i32_0 = arith.constant 0 : i32
    %c0_i32_1 = arith.constant 0 : i32
    return %arg0, %c0_i32, %c0_i32_0 : i32, i32, i32
  }
  func.func @transform_1(%arg0: i32, %arg1: i32) -> (i32, i32, i32) {
    %c0_i32 = arith.constant 0 : i32
    %c0_i32_0 = arith.constant 0 : i32
    %c0_i32_1 = arith.constant 0 : i32
    %c0_i32_2 = arith.constant 0 : i32
    return %c0_i32, %c0_i32_0, %c0_i32_1 : i32, i32, i32
  }
  func.func @transform_2(%arg0: i32, %arg1: i32) -> (i32, i32, i32) {
    %c0_i32 = arith.constant 0 : i32
    %c0_i32_0 = arith.constant 0 : i32
    %c0_i32_1 = arith.constant 0 : i32
    %c0_i32_2 = arith.constant 0 : i32
    return %c0_i32, %c0_i32_0, %c0_i32_1 : i32, i32, i32
  }
  func.func @transform_3(%arg0: i32, %arg1: i32) -> (i32, i32, i32, i32) {
    %c0_i32 = arith.constant 0 : i32
    %c0_i32_0 = arith.constant 0 : i32
    %c0_i32_1 = arith.constant 0 : i32
    %c0_i32_2 = arith.constant 0 : i32
    return %arg0, %c0_i32, %c0_i32_0, %c0_i32_1 : i32, i32, i32, i32
  }
  func.func @transform_4(%arg0: i32, %arg1: i32) -> (i32, i32, i32) {
    %c0_i32 = arith.constant 0 : i32
    %c0_i32_0 = arith.constant 0 : i32
    return %arg0, %c0_i32, %arg1 : i32, i32, i32
  }
  func.func @transform_5(%arg0: i32, %arg1: i32) -> (i32, i32, i32, i32) {
    %c0_i32 = arith.constant 0 : i32
    %c0_i32_0 = arith.constant 0 : i32
    %c0_i32_1 = arith.constant 0 : i32
    return %arg0, %arg1, %c0_i32, %c0_i32_0 : i32, i32, i32, i32
  }
}

</mosaic_0001>

<llo_original>
// kernel: tpu_custom_call.1
$region0: #{tpu_custom_call.1}
  #allocation0 [shape = 'u32[]', space=smem, size = 0x4, offset = 0x4, fixed_abs, tag = 'smem constant byte address 0x4 - core index']
  #allocation1 [shape = 'u32[72,128]{1,0:T(1,128)}', space=vmem, size = 0x9000, scoped, tag = 'internal scratch']
  %s0 = inlined_call_operand.hbm [shape: f32[2,8,32], index: 0, kind: input, shape index: {}]
  %s1 = inlined_call_operand.hbm [shape: f32[1,32,96], index: 1, kind: input, shape index: {}]
  %s2 = inlined_call_operand.hbm [shape: f32[1,1,96], index: 2, kind: input, shape index: {}]
  %s3 = inlined_call_operand.vmem [shape: f32[2,1,1,8], index: 3, kind: input, shape index: {}]
  %s4 = inlined_call_operand.hbm [shape: f32[2,8,32], index: 4, kind: output, shape index: {0}]
  %s5 = inlined_call_operand.hbm [shape: f32[2,4,8,8], index: 5, kind: output, shape index: {1}]
  %6 = xla_tuple %s4, %s5
  %s7 = sld [smem:[#allocation0]]
  $region69: #{tpu_custom_call.1} parent=0
    _
  %s9 = ssub.s32 1, %s7
  %s10 = scalar_select 0, %s9, %s7
  $region1: #{tpu_custom_call.1} parent=0
    #allocation2 [shape = 'u8[8192]{0}', space=vmem, size = 0x2000, scoped, tag = 'input window, operand 0']
    #allocation3 [shape = 's32[2]{0}', space=sflag, size = 0x8, scoped, tag = 'scoped memory for tpu_custom_call.1']
    #allocation4 [shape = 's32[2]{0}', space=sflag, size = 0x8, scoped, tag = 'scoped memory for tpu_custom_call.1']
    #allocation5 [shape = 'u8[16384]{0}', space=vmem, size = 0x4000, scoped, tag = 'input window, operand 1, single buffered']
    #allocation6 [shape = 's32[1]{0}', space=sflag, size = 0x4, scoped, tag = 'scoped memory for tpu_custom_call.1']
    #allocation7 [shape = 'u8[512]{0}', space=vmem, size = 0x400, scoped, tag = 'input window, operand 2, single buffered']
    #allocation8 [shape = 'u8[8192]{0}', space=vmem, size = 0x2000, scoped, tag = 'output window, operand 0']
    #allocation9 [shape = 'u8[32768]{0}', space=vmem, size = 0x8000, scoped, tag = 'output window, operand 1']
    #allocation10 [shape = 's32[2]{0}', space=sflag, size = 0x8, scoped, tag = 'scoped memory for tpu_custom_call.1']
    %11 = vsyncpa [#allocation3], 0
    %s12 = scalar_lea.sflag [#allocation3], 1
    %13 = vsyncpa %s12, 0
    %14 = vsyncpa [#allocation6], 0
    %15 = vsyncpa [#allocation4], 0
    %s16 = scalar_lea.sflag [#allocation4], 1
    %17 = vsyncpa %s16, 0
    %18 = vsyncpa [#allocation10], 0
    %s19 = scalar_lea.sflag [#allocation10], 1
    %20 = vsyncpa %s19, 0
    loop: start=0, step=1, limit=4
    $region2: #{tpu_custom_call.1} parent=1 // loop_pre_header
      _
    $region3: #{tpu_custom_call.1} parent=1 // loop_header
      %s22 = sphi 0, %s26
      %p23 = scmp.ge.s32.totalorder %s22, 4
      %s29 = sphi 0, %s41
      %s30 = sphi 0, %s37
      %s31 = sphi 0, %s29
      %s32 = sphi 0, %s30
      %s33 = sphi 0, %s31
      %s34 = sphi 0, %s32
      %s44 = sphi 0, %s46
      %s47 = sphi 0, %s44
      %s48 = sphi 0, %s47
      %s64 = sphi 0, %s48
      %s68 = sphi 0, %s68
      %s70 = sphi 0, %s68
      %s71 = sphi 0, %s70
      %s85 = sphi 0, %s71
      %s89 = sphi 0, %s89
      %s91 = sphi 0, %s89
      %s92 = sphi 0, %s91
      %s106 = sphi 0, %s92
      %s112 = sphi 0, %s114
      %s115 = sphi 0, %s112
      %s116 = sphi 0, %s115
      %s132 = sphi 0, %s116
      %s140 = sphi 0, %s142
      %s143 = sphi 0, %s140
      %s144 = sphi 0, %s143
      %s160 = sphi 0, %s144
      %s168 = sphi 0, %s170
      %s171 = sphi 0, %s168
      %s172 = sphi 0, %s171
      %s188 = sphi 0, %s172
    $region4: #{tpu_custom_call.1} parent=1 // loop_header_branch
      %25 = sbr.rel (%p23) target = $region8
    $region5: #{tpu_custom_call.1} parent=1 // loop_body
      %s27 = ssub.s32 %s22, 1
      %s28 = ssub.s32 %s22, 2
      %s35 = sadd.s32 1, %s30
      %p36 = scmp.ge.s32.totalorder %s35, 1
      %s37 = scalar_select %p36, 0, %s35
      %s38 = sadd.s32 1, %s29
      %s39 = scalar_select %p36, %s38, %s29
      %p40 = scmp.ge.s32.totalorder %s39, 2
      %s41 = scalar_select %p40, 0, %s39
      %s42 = ssub.s32 %s29, %s41
      %p43 = scmp.eq.s32.totalorder %s42, 0
      %s45 = sadd.s32 %s44, 1
      %s46 = scalar_select %p43, %s44, %s45
      %p49 = pneg %p43
      %p50 = scmp.eq.s32.totalorder %s22, 1
      %p51 = por %p49, %p50
      %p52 = scmp.ne.s32.totalorder %s44, %s47
      %p53 = scmp.eq.s32.totalorder %s22, 0
      %p54 = por %p52, %p53
      %p55 = scmp.ne.s32.totalorder %s44, %s47
      %p56 = scmp.eq.s32.totalorder %s27, 1
      %p57 = por %p55, %p56
      %p58 = scmp.ne.s32.totalorder %s47, %s48
      %p59 = scmp.eq.s32.totalorder %s27, 0
      %p60 = por %p58, %p59
      %p61 = scmp.ne.s32.totalorder %s47, %s48
      %p62 = scmp.eq.s32.totalorder %s28, 1
      %p63 = por %p61, %p62
      %p65 = scmp.ne.s32.totalorder %s48, %s64
      %p66 = scmp.eq.s32.totalorder %s28, 0
      %p67 = por %p65, %p66
      %s69 = sadd.s32 %s68, 1
      %p72 = scmp.eq.s32.totalorder %s22, 1
      %p73 = scmp.ne.s32.totalorder %s68, %s70
      %p74 = scmp.eq.s32.totalorder %s22, 0
      %p75 = por %p73, %p74
      %p76 = scmp.ne.s32.totalorder %s68, %s70
      %p77 = scmp.eq.s32.totalorder %s27, 1
      %p78 = por %p76, %p77
      %p79 = scmp.ne.s32.totalorder %s70, %s71
      %p80 = scmp.eq.s32.totalorder %s27, 0
      %p81 = por %p79, %p80
      %p82 = scmp.ne.s32.totalorder %s70, %s71
      %p83 = scmp.eq.s32.totalorder %s28, 1
      %p84 = por %p82, %p83
      %p86 = scmp.ne.s32.totalorder %s71, %s85
      %p87 = scmp.eq.s32.totalorder %s28, 0
      %p88 = por %p86, %p87
      %s90 = sadd.s32 %s89, 1
      %p93 = scmp.eq.s32.totalorder %s22, 1
      %p94 = scmp.ne.s32.totalorder %s89, %s91
      %p95 = scmp.eq.s32.totalorder %s22, 0
      %p96 = por %p94, %p95
      %p97 = scmp.ne.s32.totalorder %s89, %s91
      %p98 = scmp.eq.s32.totalorder %s27, 1
      %p99 = por %p97, %p98
      %p100 = scmp.ne.s32.totalorder %s91, %s92
      %p101 = scmp.eq.s32.totalorder %s27, 0
      %p102 = por %p100, %p101
      %p103 = scmp.ne.s32.totalorder %s91, %s92
      %p104 = scmp.eq.s32.totalorder %s28, 1
      %p105 = por %p103, %p104
      %p107 = scmp.ne.s32.totalorder %s92, %s106
      %p108 = scmp.eq.s32.totalorder %s28, 0
      %p109 = por %p107, %p108
      %s110 = ssub.s32 %s29, %s41
      %p111 = scmp.eq.s32.totalorder %s110, 0
      %s113 = sadd.s32 %s112, 1
      %s114 = scalar_select %p111, %s112, %s113
      %p117 = pneg %p111
      %p118 = scmp.eq.s32.totalorder %s22, 1
      %p119 = por %p117, %p118
      %p120 = scmp.ne.s32.totalorder %s112, %s115
      %p121 = scmp.eq.s32.totalorder %s22, 0
      %p122 = por %p120, %p121
      %p123 = scmp.ne.s32.totalorder %s112, %s115
      %p124 = scmp.eq.s32.totalorder %s27, 1
      %p125 = por %p123, %p124
      %p126 = scmp.ne.s32.totalorder %s115, %s116
      %p127 = scmp.eq.s32.totalorder %s27, 0
      %p128 = por %p126, %p127
      %p129 = scmp.ne.s32.totalorder %s115, %s116
      %p130 = scmp.eq.s32.totalorder %s28, 1
      %p131 = por %p129, %p130
      %p133 = scmp.ne.s32.totalorder %s116, %s132
      %p134 = scmp.eq.s32.totalorder %s28, 0
      %p135 = por %p133, %p134
      %s136 = ssub.s32 %s29, %s41
      %s137 = ssub.s32 %s30, %s37
      %s138 = sor.u32 %s136, %s137
      %p139 = scmp.eq.s32.totalorder %s138, 0
      %s141 = sadd.s32 %s140, 1
      %s142 = scalar_select %p139, %s140, %s141
      %p145 = pneg %p139
      %p146 = scmp.eq.s32.totalorder %s22, 1
      %p147 = por %p145, %p146
      %p148 = scmp.ne.s32.totalorder %s140, %s143
      %p149 = scmp.eq.s32.totalorder %s22, 0
      %p150 = por %p148, %p149
      %p151 = scmp.ne.s32.totalorder %s140, %s143
      %p152 = scmp.eq.s32.totalorder %s27, 1
      %p153 = por %p151, %p152
      %p154 = scmp.ne.s32.totalorder %s143, %s144
      %p155 = scmp.eq.s32.totalorder %s27, 0
      %p156 = por %p154, %p155
      %p157 = scmp.ne.s32.totalorder %s143, %s144
      %p158 = scmp.eq.s32.totalorder %s28, 1
      %p159 = por %p157, %p158
      %p161 = scmp.ne.s32.totalorder %s144, %s160
      %p162 = scmp.eq.s32.totalorder %s28, 0
      %p163 = por %p161, %p162
      %s164 = ssub.s32 %s29, %s41
      %s165 = ssub.s32 %s30, %s37
      %s166 = sor.u32 %s164, %s165
      %p167 = scmp.eq.s32.totalorder %s166, 0
      %s169 = sadd.s32 %s168, 1
      %s170 = scalar_select %p167, %s168, %s169
      %p173 = pneg %p167
      %p174 = scmp.eq.s32.totalorder %s22, 1
      %p175 = por %p173, %p174
      %p176 = scmp.ne.s32.totalorder %s168, %s171
      %p177 = scmp.eq.s32.totalorder %s22, 0
      %p178 = por %p176, %p177
      %p179 = scmp.ne.s32.totalorder %s168, %s171
      %p180 = scmp.eq.s32.totalorder %s27, 1
      %p181 = por %p179, %p180
      %p182 = scmp.ne.s32.totalorder %s171, %s172
      %p183 = scmp.eq.s32.totalorder %s27, 0
      %p184 = por %p182, %p183
      %p185 = scmp.ne.s32.totalorder %s171, %s172
      %p186 = scmp.eq.s32.totalorder %s28, 1
      %p187 = por %p185, %p186
      %p189 = scmp.ne.s32.totalorder %s172, %s188
      %p190 = scmp.eq.s32.totalorder %s28, 0
      %p191 = por %p189, %p190
      %p192 = scmp.le.s32.totalorder 1, %s22
      %p193 = scmp.lt.s32.totalorder %s22, 3
      %p194 = pnand %p192, %p193
      %p195 = pneg %p194
      // Predicated region
      $region9: #{tpu_custom_call.1} parent=5 // pred_check
        _
      $region10: #{tpu_custom_call.1} parent=5 // pred_check_branch
        %197 = sbr.rel (%p194) target = $region12
      $region11: #{tpu_custom_call.1} parent=5 // pred_region
        %s198 = ssub.s32 %s22, 1
        // Predicated region
        $region13: #{tpu_custom_call.1} parent=11 // pred_check
          %p199 = pneg %p81
        $region14: #{tpu_custom_call.1} parent=11 // pred_check_branch
          %201 = sbr.rel (%p199) target = $region16
        $region15: #{tpu_custom_call.1} parent=11 // pred_region
          %203 = vsyncadd [#allocation6], 0
          %s204 = sshll.u32 %s1, 4
          %s205 = int_to_ptr.hbm [resolvable:$true] %s204
          %s206 = sshll.u32 [#allocation5], 4
          %s207 = int_to_ptr.vmem [resolvable:$true] %s206
          %212 = dma.hbm_to_vmem [thread:$0]  %s205, 512, %s207, [#allocation6], 128, 128, 8
        $region16: #{tpu_custom_call.1} parent=11 // pred_fallthru
          _
        // Predicated region
        $region17: #{tpu_custom_call.1} parent=11 // pred_check
          %p213 = pneg %p102
        $region18: #{tpu_custom_call.1} parent=11 // pred_check_branch
          %215 = sbr.rel (%p213) target = $region20
        $region19: #{tpu_custom_call.1} parent=11 // pred_region
          %217 = vsyncadd [#allocation6], 0
          %s219 = sshll.u32 %s2, 4
          %s220 = int_to_ptr.hbm [resolvable:$true] %s219
          %s221 = sshll.u32 [#allocation7], 4
          %s222 = int_to_ptr.vmem [resolvable:$true] %s221
          %224 = dma.hbm_to_vmem [thread:$0]  %s220, 16, %s222, [#allocation6]
        $region20: #{tpu_custom_call.1} parent=11 // pred_fallthru
          _
      $region12: #{tpu_custom_call.1} parent=5 // pred_fallthru
        _
      %p225 = scmp.lt.s32.totalorder %s22, 2
      // Predicated region
      $region21: #{tpu_custom_call.1} parent=5 // pred_check
        %p226 = pneg %p225
      $region22: #{tpu_custom_call.1} parent=5 // pred_check_branch
        %228 = sbr.rel (%p226) target = $region24
      $region23: #{tpu_custom_call.1} parent=5 // pred_region
        // Predicated region
        $region25: #{tpu_custom_call.1} parent=23 // pred_check
          %p229 = pneg %p54
        $region26: #{tpu_custom_call.1} parent=23 // pred_check_branch
          %231 = sbr.rel (%p229) target = $region28
        $region27: #{tpu_custom_call.1} parent=23 // pred_region
          %s232 = sand.u32 %s44, 1
          %s233 = scalar_lea.sflag [#allocation3], %s232
          %s234 = sand.u32 %s44, 1
          %s235 = smul.addr %s234, 8
          %s236 = scalar_lea.vmem [#allocation2], %s235
          %238 = vsyncadd %s233, 0
          %s239 = smul.addr %s29, 8
          %s240 = scalar_lea.hbm %s0, %s239
          %s242 = sshll.u32 %s240, 4
          %s243 = int_to_ptr.hbm [resolvable:$true] %s242
          %s244 = sshll.u32 %s236, 4
          %s245 = int_to_ptr.vmem [resolvable:$true] %s244
          %247 = dma.hbm_to_vmem [thread:$0]  %s243, 128, %s245, %s233
        $region28: #{tpu_custom_call.1} parent=23 // pred_fallthru
          _
        // Predicated region
        $region29: #{tpu_custom_call.1} parent=23 // pred_check
          %p248 = pneg %p122
        $region30: #{tpu_custom_call.1} parent=23 // pred_check_branch
          %250 = sbr.rel (%p248) target = $region32
        $region31: #{tpu_custom_call.1} parent=23 // pred_region
          %p251 = scmp.lt.s32.totalorder %s29, 1
          %s252 = scalar_select %p251, %s29, 1
          %s253 = scalar_lea.vmem %s3, %s252
        $region32: #{tpu_custom_call.1} parent=23 // pred_fallthru
          _
      $region24: #{tpu_custom_call.1} parent=5 // pred_fallthru
        _
      %p254 = scmp.le.s32.totalorder 1, %s22
      %p255 = scmp.lt.s32.totalorder %s22, 3
      %p256 = pnand %p254, %p255
      %p257 = pneg %p256
      // Predicated region
      $region33: #{tpu_custom_call.1} parent=5 // pred_check
        _
      $region34: #{tpu_custom_call.1} parent=5 // pred_check_branch
        %259 = sbr.rel (%p256) target = $region36
      $region35: #{tpu_custom_call.1} parent=5 // pred_region
        %s260 = ssub.s32 %s22, 1
        %s261 = sand.u32 %s47, 1
        %s262 = scalar_lea.sflag [#allocation3], %s261
        %s263 = sand.u32 %s47, 1
        %s264 = smul.addr %s263, 8
        %s265 = scalar_lea.vmem [#allocation2], %s264
        // Predicated region
        $region37: #{tpu_custom_call.1} parent=35 // pred_check
          %p266 = pneg %p60
        $region38: #{tpu_custom_call.1} parent=35 // pred_check_branch
          %268 = sbr.rel (%p266) target = $region40
        $region39: #{tpu_custom_call.1} parent=35 // pred_region
          %270 = dma.done %s262, 128
        $region40: #{tpu_custom_call.1} parent=35 // pred_fallthru
          _
        // Predicated region
        $region41: #{tpu_custom_call.1} parent=35 // pred_check
          %p271 = pneg %p81
        $region42: #{tpu_custom_call.1} parent=35 // pred_check_branch
          %273 = sbr.rel (%p271) target = $region44
        $region43: #{tpu_custom_call.1} parent=35 // pred_region
          %275 = dma.done [#allocation6], 512
        $region44: #{tpu_custom_call.1} parent=35 // pred_fallthru
          _
        // Predicated region
        $region45: #{tpu_custom_call.1} parent=35 // pred_check
          %p276 = pneg %p102
        $region46: #{tpu_custom_call.1} parent=35 // pred_check_branch
          %278 = sbr.rel (%p276) target = $region48
        $region47: #{tpu_custom_call.1} parent=35 // pred_region
          %280 = dma.done [#allocation6], 16
        $region48: #{tpu_custom_call.1} parent=35 // pred_fallthru
          _
        %s281 = sand.u32 %s47, 1
        %s282 = scalar_lea.sflag [#allocation3], %s281
        %s283 = sand.u32 %s47, 1
        %s284 = smul.addr %s283, 8
        %s285 = scalar_lea.vmem [#allocation2], %s284
        %p286 = pneg %p60
        %p287 = pneg %p57
        %p288 = pneg %p81
        %p289 = pneg %p78
        %p290 = pneg %p102
        %p291 = pneg %p99
        %p292 = scmp.lt.s32.totalorder %s31, 1
        %s293 = scalar_select %p292, %s31, 1
        %s294 = scalar_lea.vmem %s3, %s293
        %p295 = pneg %p128
        %p296 = pneg %p125
        %p297 = pneg %p156
        %p298 = pneg %p153
        %s299 = sand.u32 %s143, 1
        %s300 = scalar_lea.sflag [#allocation4], %s299
        %s301 = sand.u32 %s143, 1
        %s302 = smul.addr %s301, 8
        %s303 = scalar_lea.vmem [#allocation8], %s302
        %p304 = pneg %p184
        %p305 = pneg %p181
        %s306 = sand.u32 %s171, 1
        %s307 = scalar_lea.sflag [#allocation10], %s306
        %s308 = sand.u32 %s171, 1
        %s309 = smul.addr %s308, 32
        %s310 = scalar_lea.vmem [#allocation9], %s309
        %p311 = scmp.lt.s32.totalorder %s31, 1
        %s312 = scalar_select %p311, %s31, 1
        %s313 = scalar_lea.vmem %s3, %s312
        %s314 = smul.u32 4, %s32
        %v315 = vld [vmem:[%s265] sm:$0xff]
        %s316 = smul.u32 %s32, 32
        %s317 = scalar_lea.vmem [#allocation5], %s316
        %v318 = vld [vmem:[%s317] sm:$0xff]
        %v319 = vld [vmem:[%s317 + $0x8] sm:$0xff]
        %v320 = vld [vmem:[%s317 + $0x10] sm:$0xff]
        %v321 = vld [vmem:[%s317 + $0x18] sm:$0xff]
        %s322 = scalar_lea.vmem [#allocation7], %s32
        %v323 = vld [vmem:[%s322] sm:$0x1]
        %v324 = vld [vmem:[%s313] sm:$0x1]
        %v326 = vperm.slane %v323, 0
        %vm328 = vcmask 261120
        %v330 = vsel %vm328, %v315, 0
        %332 = vmatpush.msra.mxu0 0.0
        %333 = vmatpush.msra.mxu0 0.0
        %334 = vmatpush.msra.mxu0 0.0
        %335 = vmatpush.msra.mxu0 0.0
        %336 = vmatpush.msra.mxu0 0.0
        %337 = vmatpush.msra.mxu0 0.0
        %338 = vmatpush.msra.mxu0 0.0
        %339 = vmatpush.msra.mxu0 0.0
        %340 = vmatpush.msra.mxu0 0.0
        %341 = vmatpush.msra.mxu0 0.0
        %342 = vmatpush.msra.mxu0 0.0
        %343 = vmatpush.msra.mxu0 0.0
        %344 = vmatpush.msra.mxu0 %v321
        %345 = vmatpush.msra.mxu0 %v320
        %346 = vmatpush.msra.mxu0 %v319
        %347 = vmatpush.msra.mxu0 %v318
        %348 = vmatmul.f32.gmra.mxu0 %v330
        %v349 = vpop.f32.mrf.mxu0
        %v350 = vadd.f32 %v326, %v349
        %351 = vdwg.mxu0
        %v353 = vperm.slane %v324, 0
        %356 = vrot.lane.b32.xlu0 %v350, 96
        %v357 = vpop.permute.xlu0 %356
        %vm358 = vcmask 64512
        %v359 = vsel %vm358, %v350, 0
        %v361 = vsel %vm358, %v357, 0
        %363 = vmatpush.xpose.msra.mxu0 0.0
        %364 = vmatpush.xpose.msra.mxu0 0.0
        %365 = vmatpush.xpose.msra.mxu0 0.0
        %366 = vmatpush.xpose.msra.mxu0 0.0
        %367 = vmatpush.xpose.msra.mxu0 0.0
        %368 = vmatpush.xpose.msra.mxu0 0.0
        %369 = vmatpush.xpose.msra.mxu0 0.0
        %370 = vmatpush.xpose.msra.mxu0 0.0
        %371 = vmatpush.xpose.msra.mxu0 0.0
        %372 = vmatpush.xpose.msra.mxu0 0.0
        %373 = vmatpush.xpose.msra.mxu0 0.0
        %374 = vmatpush.xpose.msra.mxu0 0.0
        %375 = vmatpush.xpose.msra.mxu0 0.0
        %376 = vmatpush.xpose.msra.mxu0 0.0
        %377 = vmatpush.xpose.msra.mxu0 0.0
        %378 = vmatpush.xpose.msra.mxu0 %v361
        %379 = vmatmul.f32.gmra.mxu0 %v359
        %v380 = vpop.f32.mrf.mxu0
        %v381 = vadd.f32 %v353, %v380
        %382 = vdwg.mxu0
        %v383 = vsel %vm358, %v381, -inf
        %384 = vmax.xlane.f32.xlu0 %v383
        %v385 = vpop.xlane.xlu0 %384
        %v386 = vsub.f32 %v381, %v385
        %v387 = vmul.f32 %v386, 1.442695
        %v388 = vpow.pop %v387
        %v389 = vsel %vm358, %v388, 0.0
        %390 = vadd.xlane.f32.xlu0 %v389
        %v391 = vpop.xlane.xlu0 %390
        %v392 = vrcp.pop %v391
        %v393 = vmul.f32 %v391, %v392
        %v394 = vsub.f32 1.0, %v393
        %v395 = vmul.f32 %v392, %v394
        %v396 = vadd.f32 %v392, %v395
        %vm397 = vweird.f32 %v391
        %vm398 = vweird.f32 %v392
        %vm399 = vmor %vm397, %vm398
        %v400 = vsel %vm399, %v392, %v396
        %v401 = vand.u32 2147483647, %v391
        %vm402 = vcmp.eq.f32.partialorder %v401, 8.507059e+37
        %v403 = vand.u32 %v391, 2147483648
        %v404 = vor.u32 1.1754944e-38, %v403
        %v405 = vsel %vm402, %v404, %v400
        %v406 = vmul.f32 %v388, %v405
        %407 = vrot.lane.b32.xlu0 %v350, 64
        %v408 = vpop.permute.xlu0 %407
        %v411 = vsel %vm358, %v406, 0
        %413 = vmatpush.msra.mxu0 0.0
        %414 = vmatpush.msra.mxu0 0.0
        %415 = vmatpush.msra.mxu0 0.0
        %416 = vmatpush.msra.mxu0 0.0
        %417 = vmatpush.msra.mxu0 0.0
        %418 = vmatpush.msra.mxu0 0.0
        %419 = vmatpush.msra.mxu0 0.0
        %420 = vmatpush.msra.mxu0 0.0
        %421 = vmatpush.msra.mxu0 0.0
        %422 = vmatpush.msra.mxu0 0.0
        %423 = vmatpush.msra.mxu0 0.0
        %424 = vmatpush.msra.mxu0 0.0
        %425 = vmatpush.msra.mxu0 0.0
        %426 = vmatpush.msra.mxu0 0.0
        %427 = vmatpush.msra.mxu0 0.0
        %428 = vmatpush.msra.mxu0 %v408
        %429 = vmatmul.f32.gmra.mxu0 %v411
        %v430 = vpop.f32.mrf.mxu0
        %v431 = vadd.f32 0.0, %v430
        %432 = vdwg.mxu0
        %433 = vst.msk [vmem:[%s310] sm:$0xff] %vm358, %v406
        %434 = vrot.lane.b32.xlu0 %v350, 120
        %v435 = vpop.permute.xlu0 %434
        %436 = vrot.lane.b32.xlu0 %v350, 88
        %v437 = vpop.permute.xlu0 %436
        %v438 = vsel %vm358, %v435, 0
        %v440 = vsel %vm358, %v437, 0
        %442 = vmatpush.xpose.msra.mxu0 0.0
        %443 = vmatpush.xpose.msra.mxu0 0.0
        %444 = vmatpush.xpose.msra.mxu0 0.0
        %445 = vmatpush.xpose.msra.mxu0 0.0
        %446 = vmatpush.xpose.msra.mxu0 0.0
        %447 = vmatpush.xpose.msra.mxu0 0.0
        %448 = vmatpush.xpose.msra.mxu0 0.0
        %449 = vmatpush.xpose.msra.mxu0 0.0
        %450 = vmatpush.xpose.msra.mxu0 0.0
        %451 = vmatpush.xpose.msra.mxu0 0.0
        %452 = vmatpush.xpose.msra.mxu0 0.0
        %453 = vmatpush.xpose.msra.mxu0 0.0
        %454 = vmatpush.xpose.msra.mxu0 0.0
        %455 = vmatpush.xpose.msra.mxu0 0.0
        %456 = vmatpush.xpose.msra.mxu0 0.0
        %457 = vmatpush.xpose.msra.mxu0 %v440
        %458 = vmatmul.f32.gmra.mxu0 %v438
        %v459 = vpop.f32.mrf.mxu0
        %v460 = vadd.f32 %v353, %v459
        %461 = vdwg.mxu0
        %v462 = vsel %vm358, %v460, -inf
        %463 = vmax.xlane.f32.xlu0 %v462
        %v464 = vpop.xlane.xlu0 %463
        %v465 = vsub.f32 %v460, %v464
        %v466 = vmul.f32 %v465, 1.442695
        %v467 = vpow.pop %v466
        %v468 = vsel %vm358, %v467, 0.0
        %469 = vadd.xlane.f32.xlu0 %v468
        %v470 = vpop.xlane.xlu0 %469
        %v471 = vrcp.pop %v470
        %v472 = vmul.f32 %v470, %v471
        %v473 = vsub.f32 1.0, %v472
        %v474 = vmul.f32 %v471, %v473
        %v475 = vadd.f32 %v471, %v474
        %vm476 = vweird.f32 %v470
        %vm477 = vweird.f32 %v471
        %vm478 = vmor %vm476, %vm477
        %v479 = vsel %vm478, %v471, %v475
        %v480 = vand.u32 2147483647, %v470
        %vm481 = vcmp.eq.f32.partialorder %v480, 8.507059e+37
        %v482 = vand.u32 %v470, 2147483648
        %v483 = vor.u32 1.1754944e-38, %v482
        %v484 = vsel %vm481, %v483, %v479
        %v485 = vmul.f32 %v467, %v484
        %486 = vrot.lane.b32.xlu0 %v350, 56
        %v487 = vpop.permute.xlu0 %486
        %v490 = vsel %vm358, %v485, 0
        %492 = vmatpush.msra.mxu0 0.0
        %493 = vmatpush.msra.mxu0 0.0
        %494 = vmatpush.msra.mxu0 0.0
        %495 = vmatpush.msra.mxu0 0.0
        %496 = vmatpush.msra.mxu0 0.0
        %497 = vmatpush.msra.mxu0 0.0
        %498 = vmatpush.msra.mxu0 0.0
        %499 = vmatpush.msra.mxu0 0.0
        %500 = vmatpush.msra.mxu0 0.0
        %501 = vmatpush.msra.mxu0 0.0
        %502 = vmatpush.msra.mxu0 0.0
        %503 = vmatpush.msra.mxu0 0.0
        %504 = vmatpush.msra.mxu0 0.0
        %505 = vmatpush.msra.mxu0 0.0
        %506 = vmatpush.msra.mxu0 0.0
        %507 = vmatpush.msra.mxu0 %v487
        %508 = vmatmul.f32.gmra.mxu0 %v490
        %v509 = vpop.f32.mrf.mxu0
        %v510 = vadd.f32 0.0, %v509
        %511 = vdwg.mxu0
        %s512 = scalar_lea.vmem %s310, 8 [#allocation9]
        %513 = vst.msk [vmem:[%s512] sm:$0xff] %vm358, %v485
        %514 = vrot.lane.b32.xlu0 %v350, 112
        %v515 = vpop.permute.xlu0 %514
        %516 = vrot.lane.b32.xlu0 %v350, 80
        %v517 = vpop.permute.xlu0 %516
        %v518 = vsel %vm358, %v515, 0
        %v520 = vsel %vm358, %v517, 0
        %522 = vmatpush.xpose.msra.mxu0 0.0
        %523 = vmatpush.xpose.msra.mxu0 0.0
        %524 = vmatpush.xpose.msra.mxu0 0.0
        %525 = vmatpush.xpose.msra.mxu0 0.0
        %526 = vmatpush.xpose.msra.mxu0 0.0
        %527 = vmatpush.xpose.msra.mxu0 0.0
        %528 = vmatpush.xpose.msra.mxu0 0.0
        %529 = vmatpush.xpose.msra.mxu0 0.0
        %530 = vmatpush.xpose.msra.mxu0 0.0
        %531 = vmatpush.xpose.msra.mxu0 0.0
        %532 = vmatpush.xpose.msra.mxu0 0.0
        %533 = vmatpush.xpose.msra.mxu0 0.0
        %534 = vmatpush.xpose.msra.mxu0 0.0
        %535 = vmatpush.xpose.msra.mxu0 0.0
        %536 = vmatpush.xpose.msra.mxu0 0.0
        %537 = vmatpush.xpose.msra.mxu0 %v520
        %538 = vmatmul.f32.gmra.mxu0 %v518
        %v539 = vpop.f32.mrf.mxu0
        %v540 = vadd.f32 %v353, %v539
        %541 = vdwg.mxu0
        %v542 = vsel %vm358, %v540, -inf
        %543 = vmax.xlane.f32.xlu0 %v542
        %v544 = vpop.xlane.xlu0 %543
        %v545 = vsub.f32 %v540, %v544
        %v546 = vmul.f32 %v545, 1.442695
        %v547 = vpow.pop %v546
        %v548 = vsel %vm358, %v547, 0.0
        %549 = vadd.xlane.f32.xlu0 %v548
        %v550 = vpop.xlane.xlu0 %549
        %v551 = vrcp.pop %v550
        %v552 = vmul.f32 %v550, %v551
        %v553 = vsub.f32 1.0, %v552
        %v554 = vmul.f32 %v551, %v553
        %v555 = vadd.f32 %v551, %v554
        %vm556 = vweird.f32 %v550
        %vm557 = vweird.f32 %v551
        %vm558 = vmor %vm556, %vm557
        %v559 = vsel %vm558, %v551, %v555
        %v560 = vand.u32 2147483647, %v550
        %vm561 = vcmp.eq.f32.partialorder %v560, 8.507059e+37
        %v562 = vand.u32 %v550, 2147483648
        %v563 = vor.u32 1.1754944e-38, %v562
        %v564 = vsel %vm561, %v563, %v559
        %v565 = vmul.f32 %v547, %v564
        %566 = vrot.lane.b32.xlu0 %v350, 48
        %v567 = vpop.permute.xlu0 %566
        %v570 = vsel %vm358, %v565, 0
        %572 = vmatpush.msra.mxu0 0.0
        %573 = vmatpush.msra.mxu0 0.0
        %574 = vmatpush.msra.mxu0 0.0
        %575 = vmatpush.msra.mxu0 0.0
        %576 = vmatpush.msra.mxu0 0.0
        %577 = vmatpush.msra.mxu0 0.0
        %578 = vmatpush.msra.mxu0 0.0
        %579 = vmatpush.msra.mxu0 0.0
        %580 = vmatpush.msra.mxu0 0.0
        %581 = vmatpush.msra.mxu0 0.0
        %582 = vmatpush.msra.mxu0 0.0
        %583 = vmatpush.msra.mxu0 0.0
        %584 = vmatpush.msra.mxu0 0.0
        %585 = vmatpush.msra.mxu0 0.0
        %586 = vmatpush.msra.mxu0 0.0
        %587 = vmatpush.msra.mxu0 %v567
        %588 = vmatmul.f32.gmra.mxu0 %v570
        %v589 = vpop.f32.mrf.mxu0
        %v590 = vadd.f32 0.0, %v589
        %591 = vdwg.mxu0
        %s592 = scalar_lea.vmem %s310, 16 [#allocation9]
        %593 = vst.msk [vmem:[%s592] sm:$0xff] %vm358, %v565
        %594 = vrot.lane.b32.xlu0 %v350, 104
        %v595 = vpop.permute.xlu0 %594
        %596 = vrot.lane.b32.xlu0 %v350, 72
        %v597 = vpop.permute.xlu0 %596
        %v598 = vsel %vm358, %v595, 0
        %v600 = vsel %vm358, %v597, 0
        %602 = vmatpush.xpose.msra.mxu0 0.0
        %603 = vmatpush.xpose.msra.mxu0 0.0
        %604 = vmatpush.xpose.msra.mxu0 0.0
        %605 = vmatpush.xpose.msra.mxu0 0.0
        %606 = vmatpush.xpose.msra.mxu0 0.0
        %607 = vmatpush.xpose.msra.mxu0 0.0
        %608 = vmatpush.xpose.msra.mxu0 0.0
        %609 = vmatpush.xpose.msra.mxu0 0.0
        %610 = vmatpush.xpose.msra.mxu0 0.0
        %611 = vmatpush.xpose.msra.mxu0 0.0
        %612 = vmatpush.xpose.msra.mxu0 0.0
        %613 = vmatpush.xpose.msra.mxu0 0.0
        %614 = vmatpush.xpose.msra.mxu0 0.0
        %615 = vmatpush.xpose.msra.mxu0 0.0
        %616 = vmatpush.xpose.msra.mxu0 0.0
        %617 = vmatpush.xpose.msra.mxu0 %v600
        %618 = vmatmul.f32.gmra.mxu0 %v598
        %v619 = vpop.f32.mrf.mxu0
        %v620 = vadd.f32 %v353, %v619
        %621 = vdwg.mxu0
        %v622 = vsel %vm358, %v620, -inf
        %623 = vmax.xlane.f32.xlu0 %v622
        %v624 = vpop.xlane.xlu0 %623
        %v625 = vsub.f32 %v620, %v624
        %v626 = vmul.f32 %v625, 1.442695
        %v627 = vpow.pop %v626
        %v628 = vsel %vm358, %v627, 0.0
        %629 = vadd.xlane.f32.xlu0 %v628
        %v630 = vpop.xlane.xlu0 %629
        %v631 = vrcp.pop %v630
        %v632 = vmul.f32 %v630, %v631
        %v633 = vsub.f32 1.0, %v632
        %v634 = vmul.f32 %v631, %v633
        %v635 = vadd.f32 %v631, %v634
        %vm636 = vweird.f32 %v630
        %vm637 = vweird.f32 %v631
        %vm638 = vmor %vm636, %vm637
        %v639 = vsel %vm638, %v631, %v635
        %v640 = vand.u32 2147483647, %v630
        %vm641 = vcmp.eq.f32.partialorder %v640, 8.507059e+37
        %v642 = vand.u32 %v630, 2147483648
        %v643 = vor.u32 1.1754944e-38, %v642
        %v644 = vsel %vm641, %v643, %v639
        %v645 = vmul.f32 %v627, %v644
        %646 = vrot.lane.b32.xlu0 %v350, 40
        %v647 = vpop.permute.xlu0 %646
        %v650 = vsel %vm358, %v645, 0
        %652 = vmatpush.msra.mxu0 0.0
        %653 = vmatpush.msra.mxu0 0.0
        %654 = vmatpush.msra.mxu0 0.0
        %655 = vmatpush.msra.mxu0 0.0
        %656 = vmatpush.msra.mxu0 0.0
        %657 = vmatpush.msra.mxu0 0.0
        %658 = vmatpush.msra.mxu0 0.0
        %659 = vmatpush.msra.mxu0 0.0
        %660 = vmatpush.msra.mxu0 0.0
        %661 = vmatpush.msra.mxu0 0.0
        %662 = vmatpush.msra.mxu0 0.0
        %663 = vmatpush.msra.mxu0 0.0
        %664 = vmatpush.msra.mxu0 0.0
        %665 = vmatpush.msra.mxu0 0.0
        %666 = vmatpush.msra.mxu0 0.0
        %667 = vmatpush.msra.mxu0 %v647
        %668 = vmatmul.f32.gmra.mxu0 %v650
        %v669 = vpop.f32.mrf.mxu0
        %v670 = vadd.f32 0.0, %v669
        %671 = vdwg.mxu0
        %s672 = scalar_lea.vmem %s310, 24 [#allocation9]
        %673 = vst.msk [vmem:[%s672] sm:$0xff] %vm358, %v645
        %675 = vrot.lane.b32.xlu0 %v510, 8
        %v676 = vpop.permute.xlu0 %675
        %679 = vrot.lane.b32.xlu0 %v590, 16
        %v680 = vpop.permute.xlu0 %679
        %683 = vrot.lane.b32.xlu0 %v670, 24
        %v684 = vpop.permute.xlu0 %683
        %v686 = vsel %vm358, %v431, %v676
        %vm687 = vcmask 130048
        %v688 = vsel %vm687, %v686, %v680
        %vm689 = vcmask 195584
        %v690 = vsel %vm689, %v688, %v684
        %691 = vst.msk [vmem:[%s303] sm:$0xff] %vm328, %v690
        %s692 = sand.u32 %s143, 1
        %s693 = scalar_lea.sflag [#allocation4], %s692
        %s694 = sand.u32 %s143, 1
        %s695 = smul.addr %s694, 8
        %s696 = scalar_lea.vmem [#allocation8], %s695
        %s697 = sand.u32 %s171, 1
        %s698 = scalar_lea.sflag [#allocation10], %s697
        %s699 = sand.u32 %s171, 1
        %s700 = smul.addr %s699, 32
        %s701 = scalar_lea.vmem [#allocation9], %s700
        // Predicated region
        $region49: #{tpu_custom_call.1} parent=35 // pred_check
          %p702 = pneg %p153
        $region50: #{tpu_custom_call.1} parent=35 // pred_check_branch
          %704 = sbr.rel (%p702) target = $region52
        $region51: #{tpu_custom_call.1} parent=35 // pred_region
          %706 = vsyncadd %s693, 0
          %s707 = sadd.s32 %s32, %s31
          %s708 = smul.addr %s707, 8
          %s709 = scalar_lea.hbm %s4, %s708
          %s711 = sshll.u32 %s696, 4
          %s712 = int_to_ptr.vmem [resolvable:$true] %s711
          %s713 = sshll.u32 %s709, 4
          %s714 = int_to_ptr.hbm [resolvable:$true] %s713
          %716 = dma.vmem_to_hbm [thread:$0]  %s712, 128, %s714, %s693
        $region52: #{tpu_custom_call.1} parent=35 // pred_fallthru
          _
        // Predicated region
        $region53: #{tpu_custom_call.1} parent=35 // pred_check
          %p717 = pneg %p181
        $region54: #{tpu_custom_call.1} parent=35 // pred_check_branch
          %719 = sbr.rel (%p717) target = $region56
        $region55: #{tpu_custom_call.1} parent=35 // pred_region
          %s720 = smul.u32 4, %s32
          %722 = vsyncadd %s698, 0
          %s723 = smul.addr %s31, 4
          %s724 = sadd.s32 %s720, %s723
          %s725 = smul.addr %s724, 8
          %s726 = scalar_lea.hbm %s5, %s725
          %s727 = sshll.u32 %s701, 4
          %s728 = int_to_ptr.vmem [resolvable:$true] %s727
          %s729 = sshll.u32 %s726, 4
          %s730 = int_to_ptr.hbm [resolvable:$true] %s729
          %735 = dma.vmem_to_hbm [thread:$0]  %s728, 512, %s730, %s698, 128, 128, 8
        $region56: #{tpu_custom_call.1} parent=35 // pred_fallthru
          _
      $region36: #{tpu_custom_call.1} parent=5 // pred_fallthru
        _
      %p736 = scmp.le.s32.totalorder 2, %s22
      // Predicated region
      $region57: #{tpu_custom_call.1} parent=5 // pred_check
        %p737 = pneg %p736
      $region58: #{tpu_custom_call.1} parent=5 // pred_check_branch
        %739 = sbr.rel (%p737) target = $region60
      $region59: #{tpu_custom_call.1} parent=5 // pred_region
        %s740 = ssub.s32 %s22, 2
        // Predicated region
        $region61: #{tpu_custom_call.1} parent=59 // pred_check
          %p741 = pneg %p159
        $region62: #{tpu_custom_call.1} parent=59 // pred_check_branch
          %743 = sbr.rel (%p741) target = $region64
        $region63: #{tpu_custom_call.1} parent=59 // pred_region
          %s744 = sand.u32 %s144, 1
          %s745 = scalar_lea.sflag [#allocation4], %s744
          %s746 = sand.u32 %s144, 1
          %s747 = smul.addr %s746, 8
          %s748 = scalar_lea.vmem [#allocation8], %s747
          %750 = dma.done %s745, 128
        $region64: #{tpu_custom_call.1} parent=59 // pred_fallthru
          _
        // Predicated region
        $region65: #{tpu_custom_call.1} parent=59 // pred_check
          %p751 = pneg %p187
        $region66: #{tpu_custom_call.1} parent=59 // pred_check_branch
          %753 = sbr.rel (%p751) target = $region68
        $region67: #{tpu_custom_call.1} parent=59 // pred_region
          %s754 = sand.u32 %s172, 1
          %s755 = scalar_lea.sflag [#allocation10], %s754
          %s756 = sand.u32 %s172, 1
          %s757 = smul.addr %s756, 32
          %s758 = scalar_lea.vmem [#allocation9], %s757
          %760 = dma.done %s755, 512
        $region68: #{tpu_custom_call.1} parent=59 // pred_fallthru
          _
      $region60: #{tpu_custom_call.1} parent=5 // pred_fallthru
        _
    $region6: #{tpu_custom_call.1} parent=1 // loop_footer
      %s26 = sadd.s32 1, %s22
    $region7: #{tpu_custom_call.1} parent=1 // loop_footer_branch
      %21 = sbr.rel target = $region3
    $region8: #{tpu_custom_call.1} parent=1 // loop_exit
      _
    %761 = vsyncpa [#allocation3], 1
    %s762 = scalar_lea.sflag [#allocation3], 1
    %763 = vsyncpa %s762, 1
    %764 = vsyncpa [#allocation6], 1
    %765 = vsyncpa [#allocation4], 1
    %s766 = scalar_lea.sflag [#allocation4], 1
    %767 = vsyncpa %s766, 1
    %768 = vsyncpa [#allocation10], 1
    %s769 = scalar_lea.sflag [#allocation10], 1
    %770 = vsyncpa %s769, 1

</llo_original>
